<compile_context>
chip_gen: v7x
topology: tpu7x:2x2x1
jax: 0.10.0
libtpu: 0.0.40
codegen_flags: <defaults>
</compile_context>

<pallas_src>
import functools

import jax
import jax.numpy as jnp
from jax.experimental import pallas as pl
from jax.experimental.pallas import tpu as pltpu

_LANE = 128     # lane width: feature dims padded to multiples of this
_MIN_TB = 16    # minimum batch tile (sublane / bf16-pack aligned)


def _round_up(x, m):
    return ((x + m - 1) // m) * m


def _cdiv(a, b):
    return (a + b - 1) // b


# ---------------------------------------------------------------------------
# Kernel
# ---------------------------------------------------------------------------
def _strategy_mlp_kernel(x_ref, w1_ref, b1_ref, w2_ref, b2_ref, w3_ref, b3_ref,
                         o_ref):
    # Layer 1: Linear(latent -> hidden) + ReLU.  MXU matmul, f32 accumulate;
    # bias-add + ReLU kept in f32 (VPU-safe on v5e, exactness for f32 path).
    h1 = jnp.dot(x_ref[...], w1_ref[...], preferred_element_type=jnp.float32)
    h1 = jnp.maximum(h1 + b1_ref[...], 0.0)

    # Dropout(0.3): identity at inference time.
    # TODO(synk): training-mode dropout (pltpu.prng_random_bits mask + 1/(1-p)
    # scaling) not emitted.

    # Layer 2: Linear(hidden -> hidden//2) + ReLU.
    h2 = jnp.dot(h1.astype(w2_ref.dtype), w2_ref[...],
                 preferred_element_type=jnp.float32)
    h2 = jnp.maximum(h2 + b2_ref[...], 0.0)

    # Layer 3: Linear(hidden//2 -> n_out); output block is lane-dense (128 cols).
    out = jnp.dot(h2.astype(w3_ref.dtype), w3_ref[...],
                  preferred_element_type=jnp.float32)
    o_ref[...] = (out + b3_ref[...]).astype(o_ref.dtype)


# ---------------------------------------------------------------------------
# One-time parameter preparation (hoisted out of the per-call path)
# ---------------------------------------------------------------------------
def prepare_params(params, compute_dtype=jnp.bfloat16):
    """Pad feature dims to x128 lanes and cast weights ONCE.

    Zero-padding is numerically exact: padded weight columns + zero biases
    give ReLU(0)=0 activations, and padded weight rows multiply those zeros.
    Returns (padded_arrays_dict, n_out).
    """
    w1, b1 = params["w1"], params["b1"]
    w2, b2 = params["w2"], params["b2"]
    w3, b3 = params["w3"], params["b3"]
    L, H = w1.shape
    H2 = w2.shape[1]
    n_out = w3.shape[1]
    HP, H2P, NP = (_round_up(d, _LANE) for d in (H, H2, n_out))

    def pad2(a, rows, cols):
        r, c = a.shape
        return jnp.pad(a, ((0, rows - r), (0, cols - c)))

    arrays = {
        # Layer-1 contraction dim L is intentionally NOT padded (full-extent
        # blocks are legal; MXU pads K internally at zero HBM cost).
        "w1": pad2(w1, L, HP).astype(compute_dtype),
        "b1": pad2(b1, 1, HP).astype(jnp.float32),
        "w2": pad2(w2, HP, H2P).astype(compute_dtype),
        "b2": pad2(b2, 1, H2P).astype(jnp.float32),
        "w3": pad2(w3, H2P, NP).astype(compute_dtype),
        "b3": pad2(b3, 1, NP).astype(jnp.float32),
    }
    return arrays, n_out


# ---------------------------------------------------------------------------
# Forward
# ---------------------------------------------------------------------------
@functools.partial(jax.jit, static_argnames=("tb", "single_buffer_weights"))
def _forward_padded(x, w1, b1, w2, b2, w3, b3, *, tb, single_buffer_weights):
    B, L = x.shape
    HP = w1.shape[1]
    H2P = w2.shape[1]
    NP = w3.shape[1]
    cdtype = w1.dtype
    itemsize = cdtype.itemsize

    Bp = _round_up(B, tb)
    n_tiles = Bp // tb

    # Only the activation pad/cast remains in the hot path.
    x_p = jnp.pad(x, ((0, Bp - B), (0, 0))).astype(cdtype)

    def batch_spec(shape):
        return pl.BlockSpec(shape, lambda i: (i, 0))

    if single_buffer_weights:
        # Constant block index -> double-buffering these is pure VMEM waste
        # (matters on v7x's 64 MiB VMEM for large hidden dims).
        def const_spec(shape):
            return pl.BlockSpec(shape, lambda i: (0, 0),
                                pipeline_mode=pl.Buffered(1))
    else:
        def const_spec(shape):
            return pl.BlockSpec(shape, lambda i: (0, 0))

    # VMEM budget derived from actual padded operand sizes (+ headroom).
    w_bytes = (L * HP + HP * H2P + H2P * NP) * itemsize + (HP + H2P + NP) * 4
    act_bytes = 2 * (tb * L * itemsize + tb * NP * 4)        # double-buffered io
    inter_bytes = tb * (HP + H2P) * 4                        # f32 intermediates
    wbuf = 1 if single_buffer_weights else 2
    est = wbuf * w_bytes + act_bytes + inter_bytes
    vmem_limit = int(min(64 * 1024 * 1024, 2 * est + 8 * 1024 * 1024))

    flops = 2 * Bp * (L * HP + HP * H2P + H2P * NP)
    bytes_accessed = (Bp * L * itemsize + w_bytes + Bp * NP * 4)

    out = pl.pallas_call(
        _strategy_mlp_kernel,
        out_shape=jax.ShapeDtypeStruct((Bp, NP), jnp.float32),
        grid=(n_tiles,),
        in_specs=[
            batch_spec((tb, L)),                            # activations (tiled)
            const_spec((L, HP)), const_spec((1, HP)),       # resident weights
            const_spec((HP, H2P)), const_spec((1, H2P)),
            const_spec((H2P, NP)), const_spec((1, NP)),
        ],
        out_specs=batch_spec((tb, NP)),                     # lane-dense stores
        compiler_params=pltpu.CompilerParams(
            dimension_semantics=("parallel",),              # batch over both TCs
            vmem_limit_bytes=vmem_limit),
        cost_estimate=pl.CostEstimate(flops=flops, transcendentals=0,
                                      bytes_accessed=bytes_accessed),
    )(x_p, w1, b1, w2, b2, w3, b3)
    return out


_single_buffer_ok = True  # flips off if pl.Buffered(1) is unsupported here


def strategy_network_forward(latent, prepared, *, tb=None):
    """Fused StrategyNetwork forward. `prepared` comes from prepare_params."""
    global _single_buffer_ok
    arrays, n_out = prepared
    B = latent.shape[0]

    if tb is None:
        tb_cap = 1024 if arrays["w1"].dtype.itemsize <= 2 else 512
        # >= 2 grid tiles for real batches (v7x megacore); tiny batches -> 1 tile.
        tb = max(_MIN_TB, min(tb_cap, _round_up(_cdiv(B, 2), _MIN_TB)))
    else:
        tb = _round_up(max(_MIN_TB, tb), _MIN_TB)

    args = (latent, arrays["w1"], arrays["b1"], arrays["w2"], arrays["b2"],
            arrays["w3"], arrays["b3"])

    if _single_buffer_ok:
        try:
            out = _forward_padded(*args, tb=tb, single_buffer_weights=True)
            return out[:B, :n_out]
        except Exception:
            _single_buffer_ok = False  # fall back to default double-buffering
    out = _forward_padded(*args, tb=tb, single_buffer_weights=False)
    return out[:B, :n_out]


# ---------------------------------------------------------------------------
# Parameters + demo
# ---------------------------------------------------------------------------
def init_params(key, latent_dim, hidden_dim):
    """Deterministic synthetic parameters (uniform, PyTorch-Linear fan-in scale)."""
    ks = jax.random.split(key, 6)

    def lin(kw, kb, fan_in, fan_out):
        bound = 1.0 / jnp.sqrt(fan_in)
        w = jax.random.uniform(kw, (fan_in, fan_out), jnp.float32, -bound, bound)
        b = jax.random.uniform(kb, (1, fan_out), jnp.float32, -bound, bound)
        return w, b

    w1, b1 = lin(ks[0], ks[1], latent_dim, hidden_dim)
    w2, b2 = lin(ks[2], ks[3], hidden_dim, hidden_dim // 2)
    w3, b3 = lin(ks[4], ks[5], hidden_dim // 2, 3)
    return {"w1": w1, "b1": b1, "w2": w2, "b2": b2, "w3": w3, "b3": b3}


def _reference_forward(latent, params):
    hp = jax.lax.Precision.HIGHEST
    h = jnp.maximum(jnp.dot(latent, params["w1"], precision=hp) + params["b1"], 0.0)
    h = jnp.maximum(jnp.dot(h, params["w2"], precision=hp) + params["b2"], 0.0)
    return jnp.dot(h, params["w3"], precision=hp) + params["b3"]


if __name__ == "__main__":
    key = jax.random.PRNGKey(0)
    k_x, k_p = jax.random.split(key)

    batch = 8
    latent_dim = 32
    hidden_dim = 64

    latent = jax.random.normal(k_x, (batch, latent_dim), jnp.float32)
    params = init_params(k_p, latent_dim, hidden_dim)

    ref = _reference_forward(latent, params)

    # f32 operand path (use on v5e or when exactness matters).
    prepared_f32 = prepare_params(params, compute_dtype=jnp.float32)
    out_f32 = strategy_network_forward(latent, prepared_f32)
    jax.block_until_ready(out_f32)
    assert out_f32.shape == (batch, 3)
    assert jnp.allclose(out_f32, ref, atol=1e-3, rtol=1e-3)

    # bf16 operand path (default: halves DMA bytes, bf16 MXU rate on v6e/v7x;
    # f32 accumulate + f32 bias/ReLU preserved).
    prepared_bf16 = prepare_params(params)  # compute_dtype=jnp.bfloat16
    out_bf16 = strategy_network_forward(latent, prepared_bf16)
    jax.block_until_ready(out_bf16)
    assert out_bf16.shape == (batch, 3)
    assert jnp.allclose(out_bf16, ref, atol=5e-2, rtol=5e-2)

    print("KERNEL_OK")
</pallas_src>

<mosaic_0001>
module attributes {stable_mosaic.version = 11 : i64} {
  func.func @_strategy_mlp_kernel(%arg0: i32, %arg1: memref<16x32xf32, #tpu.memory_space<vmem>>, %arg2: memref<32x128xf32, #tpu.memory_space<vmem>>, %arg3: memref<1x128xf32, #tpu.memory_space<vmem>>, %arg4: memref<128x128xf32, #tpu.memory_space<vmem>>, %arg5: memref<1x128xf32, #tpu.memory_space<vmem>>, %arg6: memref<128x128xf32, #tpu.memory_space<vmem>>, %arg7: memref<1x128xf32, #tpu.memory_space<vmem>>, %arg8: memref<16x128xf32, #tpu.memory_space<vmem>>) attributes {dimension_semantics = [#tpu.dimension_semantics<parallel>], iteration_bounds = array<i64: 1>, scalar_prefetch = 0 : i64, scratch_operands = 0 : i64, tpu.core_type = #tpu.core_type<tc>, window_params = [{transform_indices = @transform_0, window_bounds = array<i64: 16, 32>}, {pipeline_mode = #tpu.pipeline_mode<synchronous>, transform_indices = @transform_1, window_bounds = array<i64: 32, 128>}, {pipeline_mode = #tpu.pipeline_mode<synchronous>, transform_indices = @transform_2, window_bounds = array<i64: 1, 128>}, {pipeline_mode = #tpu.pipeline_mode<synchronous>, transform_indices = @transform_3, window_bounds = array<i64: 128, 128>}, {pipeline_mode = #tpu.pipeline_mode<synchronous>, transform_indices = @transform_4, window_bounds = array<i64: 1, 128>}, {pipeline_mode = #tpu.pipeline_mode<synchronous>, transform_indices = @transform_5, window_bounds = array<i64: 128, 128>}, {pipeline_mode = #tpu.pipeline_mode<synchronous>, transform_indices = @transform_6, window_bounds = array<i64: 1, 128>}, {transform_indices = @transform_7, window_bounds = array<i64: 16, 128>}]} {
    %c0 = arith.constant 0 : index
    %c0_0 = arith.constant 0 : index
    %0 = vector.load %arg1[%c0, %c0_0] : memref<16x32xf32, #tpu.memory_space<vmem>>, vector<16x32xf32>
    %c0_1 = arith.constant 0 : index
    %c0_2 = arith.constant 0 : index
    %1 = vector.load %arg2[%c0_1, %c0_2] : memref<32x128xf32, #tpu.memory_space<vmem>>, vector<32x128xf32>
    %cst = arith.constant dense<0.000000e+00> : vector<16x128xf32>
    %2 = tpu.matmul %0, %1, %cst {dimension_numbers = #tpu.dot_dimension_numbers<[1], [0], [0], [1], [0, 0, 1, 1], [], []>} : vector<16x32xf32>, vector<32x128xf32>, vector<16x128xf32> -> vector<16x128xf32>
    %c0_3 = arith.constant 0 : index
    %c0_4 = arith.constant 0 : index
    %3 = vector.load %arg3[%c0_3, %c0_4] : memref<1x128xf32, #tpu.memory_space<vmem>>, vector<1x128xf32>
    %4 = vector.broadcast %3 : vector<1x128xf32> to vector<16x128xf32>
    %5 = arith.addf %2, %4 : vector<16x128xf32>
    %cst_5 = arith.constant 0.000000e+00 : f32
    %6 = vector.broadcast %cst_5 : f32 to vector<16x128xf32>
    %7 = arith.maximumf %5, %6 : vector<16x128xf32>
    %c0_6 = arith.constant 0 : index
    %c0_7 = arith.constant 0 : index
    %8 = vector.load %arg4[%c0_6, %c0_7] : memref<128x128xf32, #tpu.memory_space<vmem>>, vector<128x128xf32>
    %cst_8 = arith.constant dense<0.000000e+00> : vector<16x128xf32>
    %9 = tpu.matmul %7, %8, %cst_8 {dimension_numbers = #tpu.dot_dimension_numbers<[1], [0], [0], [1], [0, 0, 1, 1], [], []>} : vector<16x128xf32>, vector<128x128xf32>, vector<16x128xf32> -> vector<16x128xf32>
    %c0_9 = arith.constant 0 : index
    %c0_10 = arith.constant 0 : index
    %10 = vector.load %arg5[%c0_9, %c0_10] : memref<1x128xf32, #tpu.memory_space<vmem>>, vector<1x128xf32>
    %11 = vector.broadcast %10 : vector<1x128xf32> to vector<16x128xf32>
    %12 = arith.addf %9, %11 : vector<16x128xf32>
    %cst_11 = arith.constant 0.000000e+00 : f32
    %13 = vector.broadcast %cst_11 : f32 to vector<16x128xf32>
    %14 = arith.maximumf %12, %13 : vector<16x128xf32>
    %c0_12 = arith.constant 0 : index
    %c0_13 = arith.constant 0 : index
    %15 = vector.load %arg6[%c0_12, %c0_13] : memref<128x128xf32, #tpu.memory_space<vmem>>, vector<128x128xf32>
    %cst_14 = arith.constant dense<0.000000e+00> : vector<16x128xf32>
    %16 = tpu.matmul %14, %15, %cst_14 {dimension_numbers = #tpu.dot_dimension_numbers<[1], [0], [0], [1], [0, 0, 1, 1], [], []>} : vector<16x128xf32>, vector<128x128xf32>, vector<16x128xf32> -> vector<16x128xf32>
    %c0_15 = arith.constant 0 : index
    %c0_16 = arith.constant 0 : index
    %17 = vector.load %arg7[%c0_15, %c0_16] : memref<1x128xf32, #tpu.memory_space<vmem>>, vector<1x128xf32>
    %18 = vector.broadcast %17 : vector<1x128xf32> to vector<16x128xf32>
    %19 = arith.addf %16, %18 : vector<16x128xf32>
    %c0_17 = arith.constant 0 : index
    %c0_18 = arith.constant 0 : index
    %20 = vector.load %arg8[%c0_17, %c0_18] : memref<16x128xf32, #tpu.memory_space<vmem>>, vector<16x128xf32>
    tpu.vector_store %arg8[%c0_17, %c0_18], %19 {strides = array<i32>} : memref<16x128xf32, #tpu.memory_space<vmem>>, vector<16x128xf32>,
    return
  }
  func.func @transform_0(%arg0: i32) -> (i32, i32) {
    %c0_i32 = arith.constant 0 : i32
    %c0_i32_0 = arith.constant 0 : i32
    return %arg0, %c0_i32 : i32, i32
  }
  func.func @transform_1(%arg0: i32) -> (i32, i32) {
    %c0_i32 = arith.constant 0 : i32
    %c0_i32_0 = arith.constant 0 : i32
    %c0_i32_1 = arith.constant 0 : i32
    return %c0_i32, %c0_i32_0 : i32, i32
  }
  func.func @transform_2(%arg0: i32) -> (i32, i32) {
    %c0_i32 = arith.constant 0 : i32
    %c0_i32_0 = arith.constant 0 : i32
    %c0_i32_1 = arith.constant 0 : i32
    return %c0_i32, %c0_i32_0 : i32, i32
  }
  func.func @transform_3(%arg0: i32) -> (i32, i32) {
    %c0_i32 = arith.constant 0 : i32
    %c0_i32_0 = arith.constant 0 : i32
    %c0_i32_1 = arith.constant 0 : i32
    return %c0_i32, %c0_i32_0 : i32, i32
  }
  func.func @transform_4(%arg0: i32) -> (i32, i32) {
    %c0_i32 = arith.constant 0 : i32
    %c0_i32_0 = arith.constant 0 : i32
    %c0_i32_1 = arith.constant 0 : i32
    return %c0_i32, %c0_i32_0 : i32, i32
  }
  func.func @transform_5(%arg0: i32) -> (i32, i32) {
    %c0_i32 = arith.constant 0 : i32
    %c0_i32_0 = arith.constant 0 : i32
    %c0_i32_1 = arith.constant 0 : i32
    return %c0_i32, %c0_i32_0 : i32, i32
  }
  func.func @transform_6(%arg0: i32) -> (i32, i32) {
    %c0_i32 = arith.constant 0 : i32
    %c0_i32_0 = arith.constant 0 : i32
    %c0_i32_1 = arith.constant 0 : i32
    return %c0_i32, %c0_i32_0 : i32, i32
  }
  func.func @transform_7(%arg0: i32) -> (i32, i32) {
    %c0_i32 = arith.constant 0 : i32
    %c0_i32_0 = arith.constant 0 : i32
    return %arg0, %c0_i32 : i32, i32
  }
}

module attributes {stable_mosaic.version = 11 : i64} {
  func.func @_strategy_mlp_kernel(%arg0: i32, %arg1: memref<16x32xf32, #tpu.memory_space<vmem>>, %arg2: memref<32x128xf32, #tpu.memory_space<vmem>>, %arg3: memref<1x128xf32, #tpu.memory_space<vmem>>, %arg4: memref<128x128xf32, #tpu.memory_space<vmem>>, %arg5: memref<1x128xf32, #tpu.memory_space<vmem>>, %arg6: memref<128x128xf32, #tpu.memory_space<vmem>>, %arg7: memref<1x128xf32, #tpu.memory_space<vmem>>, %arg8: memref<16x128xf32, #tpu.memory_space<vmem>>) attributes {dimension_semantics = [#tpu.dimension_semantics<parallel>], iteration_bounds = array<i64: 1>, scalar_prefetch = 0 : i64, scratch_operands = 0 : i64, tpu.core_type = #tpu.core_type<tc>, window_params = [{transform_indices = @transform_0, window_bounds = array<i64: 16, 32>}, {pipeline_mode = #tpu.pipeline_mode<synchronous>, transform_indices = @transform_1, window_bounds = array<i64: 32, 128>}, {pipeline_mode = #tpu.pipeline_mode<synchronous>, transform_indices = @transform_2, window_bounds = array<i64: 1, 128>}, {pipeline_mode = #tpu.pipeline_mode<synchronous>, transform_indices = @transform_3, window_bounds = array<i64: 128, 128>}, {pipeline_mode = #tpu.pipeline_mode<synchronous>, transform_indices = @transform_4, window_bounds = array<i64: 1, 128>}, {pipeline_mode = #tpu.pipeline_mode<synchronous>, transform_indices = @transform_5, window_bounds = array<i64: 128, 128>}, {pipeline_mode = #tpu.pipeline_mode<synchronous>, transform_indices = @transform_6, window_bounds = array<i64: 1, 128>}, {transform_indices = @transform_7, window_bounds = array<i64: 16, 128>}]} {
    %c0 = arith.constant 0 : index
    %c0_0 = arith.constant 0 : index
    %0 = vector.load %arg1[%c0, %c0_0] : memref<16x32xf32, #tpu.memory_space<vmem>>, vector<16x32xf32>
    %c0_1 = arith.constant 0 : index
    %c0_2 = arith.constant 0 : index
    %1 = vector.load %arg2[%c0_1, %c0_2] : memref<32x128xf32, #tpu.memory_space<vmem>>, vector<32x128xf32>
    %cst = arith.constant dense<0.000000e+00> : vector<16x128xf32>
    %2 = tpu.matmul %0, %1, %cst {dimension_numbers = #tpu.dot_dimension_numbers<[1], [0], [0], [1], [0, 0, 1, 1], [], []>} : vector<16x32xf32>, vector<32x128xf32>, vector<16x128xf32> -> vector<16x128xf32>
    %c0_3 = arith.constant 0 : index
    %c0_4 = arith.constant 0 : index
    %3 = vector.load %arg3[%c0_3, %c0_4] : memref<1x128xf32, #tpu.memory_space<vmem>>, vector<1x128xf32>
    %4 = vector.broadcast %3 : vector<1x128xf32> to vector<16x128xf32>
    %5 = arith.addf %2, %4 : vector<16x128xf32>
    %cst_5 = arith.constant 0.000000e+00 : f32
    %6 = vector.broadcast %cst_5 : f32 to vector<16x128xf32>
    %7 = arith.maximumf %5, %6 : vector<16x128xf32>
    %c0_6 = arith.constant 0 : index
    %c0_7 = arith.constant 0 : index
    %8 = vector.load %arg4[%c0_6, %c0_7] : memref<128x128xf32, #tpu.memory_space<vmem>>, vector<128x128xf32>
    %cst_8 = arith.constant dense<0.000000e+00> : vector<16x128xf32>
    %9 = tpu.matmul %7, %8, %cst_8 {dimension_numbers = #tpu.dot_dimension_numbers<[1], [0], [0], [1], [0, 0, 1, 1], [], []>} : vector<16x128xf32>, vector<128x128xf32>, vector<16x128xf32> -> vector<16x128xf32>
    %c0_9 = arith.constant 0 : index
    %c0_10 = arith.constant 0 : index
    %10 = vector.load %arg5[%c0_9, %c0_10] : memref<1x128xf32, #tpu.memory_space<vmem>>, vector<1x128xf32>
    %11 = vector.broadcast %10 : vector<1x128xf32> to vector<16x128xf32>
    %12 = arith.addf %9, %11 : vector<16x128xf32>
    %cst_11 = arith.constant 0.000000e+00 : f32
    %13 = vector.broadcast %cst_11 : f32 to vector<16x128xf32>
    %14 = arith.maximumf %12, %13 : vector<16x128xf32>
    %c0_12 = arith.constant 0 : index
    %c0_13 = arith.constant 0 : index
    %15 = vector.load %arg6[%c0_12, %c0_13] : memref<128x128xf32, #tpu.memory_space<vmem>>, vector<128x128xf32>
    %cst_14 = arith.constant dense<0.000000e+00> : vector<16x128xf32>
    %16 = tpu.matmul %14, %15, %cst_14 {dimension_numbers = #tpu.dot_dimension_numbers<[1], [0], [0], [1], [0, 0, 1, 1], [], []>} : vector<16x128xf32>, vector<128x128xf32>, vector<16x128xf32> -> vector<16x128xf32>
    %c0_15 = arith.constant 0 : index
    %c0_16 = arith.constant 0 : index
    %17 = vector.load %arg7[%c0_15, %c0_16] : memref<1x128xf32, #tpu.memory_space<vmem>>, vector<1x128xf32>
    %18 = vector.broadcast %17 : vector<1x128xf32> to vector<16x128xf32>
    %19 = arith.addf %16, %18 : vector<16x128xf32>
    %c0_17 = arith.constant 0 : index
    %c0_18 = arith.constant 0 : index
    %20 = vector.load %arg8[%c0_17, %c0_18] : memref<16x128xf32, #tpu.memory_space<vmem>>, vector<16x128xf32>
    tpu.vector_store %arg8[%c0_17, %c0_18], %19 {strides = array<i32>} : memref<16x128xf32, #tpu.memory_space<vmem>>, vector<16x128xf32>,
    return
  }
  func.func @transform_0(%arg0: i32) -> (i32, i32) {
    %c0_i32 = arith.constant 0 : i32
    %c0_i32_0 = arith.constant 0 : i32
    return %arg0, %c0_i32 : i32, i32
  }
  func.func @transform_1(%arg0: i32) -> (i32, i32) {
    %c0_i32 = arith.constant 0 : i32
    %c0_i32_0 = arith.constant 0 : i32
    %c0_i32_1 = arith.constant 0 : i32
    return %c0_i32, %c0_i32_0 : i32, i32
  }
  func.func @transform_2(%arg0: i32) -> (i32, i32) {
    %c0_i32 = arith.constant 0 : i32
    %c0_i32_0 = arith.constant 0 : i32
    %c0_i32_1 = arith.constant 0 : i32
    return %c0_i32, %c0_i32_0 : i32, i32
  }
  func.func @transform_3(%arg0: i32) -> (i32, i32) {
    %c0_i32 = arith.constant 0 : i32
    %c0_i32_0 = arith.constant 0 : i32
    %c0_i32_1 = arith.constant 0 : i32
    return %c0_i32, %c0_i32_0 : i32, i32
  }
  func.func @transform_4(%arg0: i32) -> (i32, i32) {
    %c0_i32 = arith.constant 0 : i32
    %c0_i32_0 = arith.constant 0 : i32
    %c0_i32_1 = arith.constant 0 : i32
    return %c0_i32, %c0_i32_0 : i32, i32
  }
  func.func @transform_5(%arg0: i32) -> (i32, i32) {
    %c0_i32 = arith.constant 0 : i32
    %c0_i32_0 = arith.constant 0 : i32
    %c0_i32_1 = arith.constant 0 : i32
    return %c0_i32, %c0_i32_0 : i32, i32
  }
  func.func @transform_6(%arg0: i32) -> (i32, i32) {
    %c0_i32 = arith.constant 0 : i32
    %c0_i32_0 = arith.constant 0 : i32
    %c0_i32_1 = arith.constant 0 : i32
    return %c0_i32, %c0_i32_0 : i32, i32
  }
  func.func @transform_7(%arg0: i32) -> (i32, i32) {
    %c0_i32 = arith.constant 0 : i32
    %c0_i32_0 = arith.constant 0 : i32
    return %arg0, %c0_i32 : i32, i32
  }
}

</mosaic_0001>

<llo_original>
// kernel: _forward_padded.1
$region0: #{_forward_padded.1}
  #allocation0 [shape = 'u32[]', space=smem, size = 0x4, offset = 0x4, fixed_abs, tag = 'smem constant byte address 0x4 - core index']
  #allocation1 [shape = 'u32[144,128]{1,0:T(1,128)}', space=vmem, size = 0x12000, scoped, tag = 'internal scratch']
  %s0 = inlined_call_operand.vmem [shape: f32[16,32], index: 0, kind: input, shape index: {}]
  %s1 = inlined_call_operand.hbm [shape: f32[32,128], index: 1, kind: input, shape index: {}]
  %s2 = inlined_call_operand.vmem [shape: f32[1,128], index: 2, kind: input, shape index: {}]
  %s3 = inlined_call_operand.hbm [shape: f32[128,128], index: 3, kind: input, shape index: {}]
  %s4 = inlined_call_operand.vmem [shape: f32[1,128], index: 4, kind: input, shape index: {}]
  %s5 = inlined_call_operand.hbm [shape: f32[128,128], index: 5, kind: input, shape index: {}]
  %s6 = inlined_call_operand.vmem [shape: f32[1,128], index: 6, kind: input, shape index: {}]
  %s7 = inlined_call_operand.hbm [shape: f32[16,128], index: 7, kind: output, shape index: {}]
  %s8 = sld [smem:[#allocation0]]
  $region50: #{_forward_padded.1} parent=0
    _
  %s10 = ssub.s32 1, %s8
  %s11 = scalar_select 0, %s10, %s8
  $region1: #{_forward_padded.1} parent=0
    #allocation2 [shape = 'u8[16384]{0}', space=vmem, size = 0x4000, scoped, tag = 'input window, operand 1, single buffered']
    #allocation3 [shape = 's32[1]{0}', space=sflag, size = 0x4, scoped, tag = 'scoped memory for _forward_padded.1']
    #allocation4 [shape = 's32[1]{0}', space=sflag, size = 0x4, scoped, tag = 'scoped memory for _forward_padded.1']
    #allocation5 [shape = 'u8[65536]{0}', space=vmem, size = 0x10000, scoped, tag = 'input window, operand 3, single buffered']
    #allocation6 [shape = 's32[1]{0}', space=sflag, size = 0x4, scoped, tag = 'scoped memory for _forward_padded.1']
    #allocation7 [shape = 'u8[65536]{0}', space=vmem, size = 0x10000, scoped, tag = 'input window, operand 5, single buffered']
    #allocation8 [shape = 'u8[8192]{0}', space=vmem, size = 0x2000, scoped, tag = 'output window, operand 0, single buffered']
    %12 = vsyncpa [#allocation3], 0
    %13 = vsyncpa [#allocation6], 0
    %14 = vsyncpa [#allocation4], 0
    // Predicated region
    $region2: #{_forward_padded.1} parent=1 // pred_check
      _
    $region3: #{_forward_padded.1} parent=1 // pred_check_branch
      %16 = sbr.rel (0) target = $region5
    $region4: #{_forward_padded.1} parent=1 // pred_region
      _
    $region5: #{_forward_padded.1} parent=1 // pred_fallthru
      _
    // Predicated region
    $region6: #{_forward_padded.1} parent=1 // pred_check
      _
    $region7: #{_forward_padded.1} parent=1 // pred_check_branch
      %18 = sbr.rel (0) target = $region9
    $region8: #{_forward_padded.1} parent=1 // pred_region
      %s20 = ssub.s32 512, 512
      %21 = vsyncadd [#allocation3], %s20
      %s22 = sshll.u32 [#allocation2], 4
      %s23 = int_to_ptr.vmem [resolvable:$true] %s22
      %28 = dma.hbm_to_vmem [thread:$0]  %s1, 512, %s23, [#allocation3], 128, 128, 8
    $region9: #{_forward_padded.1} parent=1 // pred_fallthru
      _
    // Predicated region
    $region10: #{_forward_padded.1} parent=1 // pred_check
      _
    $region11: #{_forward_padded.1} parent=1 // pred_check_branch
      %30 = sbr.rel (0) target = $region13
    $region12: #{_forward_padded.1} parent=1 // pred_region
      _
    $region13: #{_forward_padded.1} parent=1 // pred_fallthru
      _
    // Predicated region
    $region14: #{_forward_padded.1} parent=1 // pred_check
      _
    $region15: #{_forward_padded.1} parent=1 // pred_check_branch
      %32 = sbr.rel (0) target = $region17
    $region16: #{_forward_padded.1} parent=1 // pred_region
      %s34 = ssub.s32 2048, 2048
      %35 = vsyncadd [#allocation6], %s34
      %s36 = sshll.u32 [#allocation5], 4
      %s37 = int_to_ptr.vmem [resolvable:$true] %s36
      %42 = dma.hbm_to_vmem [thread:$0]  %s3, 2048, %s37, [#allocation6], 128, 128, 8
    $region17: #{_forward_padded.1} parent=1 // pred_fallthru
      _
    // Predicated region
    $region18: #{_forward_padded.1} parent=1 // pred_check
      _
    $region19: #{_forward_padded.1} parent=1 // pred_check_branch
      %44 = sbr.rel (0) target = $region21
    $region20: #{_forward_padded.1} parent=1 // pred_region
      _
    $region21: #{_forward_padded.1} parent=1 // pred_fallthru
      _
    // Predicated region
    $region22: #{_forward_padded.1} parent=1 // pred_check
      _
    $region23: #{_forward_padded.1} parent=1 // pred_check_branch
      %46 = sbr.rel (0) target = $region25
    $region24: #{_forward_padded.1} parent=1 // pred_region
      %s48 = ssub.s32 2048, 2048
      %49 = vsyncadd [#allocation6], %s48
      %s50 = sshll.u32 [#allocation7], 4
      %s51 = int_to_ptr.vmem [resolvable:$true] %s50
      %56 = dma.hbm_to_vmem [thread:$0]  %s5, 2048, %s51, [#allocation6], 128, 128, 8
    $region25: #{_forward_padded.1} parent=1 // pred_fallthru
      _
    // Predicated region
    $region26: #{_forward_padded.1} parent=1 // pred_check
      _
    $region27: #{_forward_padded.1} parent=1 // pred_check_branch
      %58 = sbr.rel (0) target = $region29
    $region28: #{_forward_padded.1} parent=1 // pred_region
      _
    $region29: #{_forward_padded.1} parent=1 // pred_fallthru
      _
    // Predicated region
    $region30: #{_forward_padded.1} parent=1 // pred_check
      _
    $region31: #{_forward_padded.1} parent=1 // pred_check_branch
      %60 = sbr.rel (0) target = $region33
    $region32: #{_forward_padded.1} parent=1 // pred_region
      %61 = dma.done [#allocation3], 512
    $region33: #{_forward_padded.1} parent=1 // pred_fallthru
      _
    // Predicated region
    $region34: #{_forward_padded.1} parent=1 // pred_check
      _
    $region35: #{_forward_padded.1} parent=1 // pred_check_branch
      %63 = sbr.rel (0) target = $region37
    $region36: #{_forward_padded.1} parent=1 // pred_region
      %64 = dma.done [#allocation6], 2048
    $region37: #{_forward_padded.1} parent=1 // pred_fallthru
      _
    // Predicated region
    $region38: #{_forward_padded.1} parent=1 // pred_check
      _
    $region39: #{_forward_padded.1} parent=1 // pred_check_branch
      %66 = sbr.rel (0) target = $region41
    $region40: #{_forward_padded.1} parent=1 // pred_region
      %67 = dma.done [#allocation6], 2048
    $region41: #{_forward_padded.1} parent=1 // pred_fallthru
      _
    %v68 = vld [vmem:[%s0] sm:$0xff]
    %v69 = vld [vmem:[%s0 + $0x8] sm:$0xff]
    %v70 = vld [vmem:[#allocation2] sm:$0xff]
    %v71 = vld [vmem:[#allocation2 + $0x8] sm:$0xff]
    %v72 = vld [vmem:[#allocation2 + $0x10] sm:$0xff]
    %v73 = vld [vmem:[#allocation2 + $0x18] sm:$0xff]
    %v74 = vld [vmem:[%s2] sm:$0x1]
    %v76 = vlaneseq
    %v77 = vshrl.u32 %v76, 7
    %v78 = vsub.s32 0, %v77
    %v79 = vrot.slane %v74, %v78
    %vm81 = vcmask 261120
    %v83 = vsel %vm81, %v68, 0
    %v86 = vsel %vm81, %v69, 0
    %88 = vmatprep.subr.mxu0 0.0
    %89 = vmatpush1.msra.mxu0 %v70
    %90 = vmatprep.subr.mxu0 0.0
    %91 = vmatpush1.msra.mxu0 %v71
    %92 = vmatprep.subr.mxu0 0.0
    %93 = vmatpush1.msra.mxu0 %v72
    %94 = vmatprep.subr.mxu0 0.0
    %95 = vmatpush1.msra.mxu0 %v73
    %96 = vmatprep.subr.mxu0 0.0
    %97 = vmatpush1.msra.mxu0 0.0
    %98 = vmatprep.subr.mxu0 0.0
    %99 = vmatpush1.msra.mxu0 0.0
    %100 = vmatprep.subr.mxu0 0.0
    %101 = vmatpush1.msra.mxu0 0.0
    %102 = vmatprep.subr.mxu0 0.0
    %103 = vmatpush1.msra.mxu0 0.0
    %104 = vmatprep.subr.mxu0 0.0
    %105 = vmatpush1.msra.mxu0 0.0
    %106 = vmatprep.subr.mxu0 0.0
    %107 = vmatpush1.msra.mxu0 0.0
    %108 = vmatprep.subr.mxu0 0.0
    %109 = vmatpush1.msra.mxu0 0.0
    %110 = vmatprep.subr.mxu0 0.0
    %111 = vmatpush1.msra.mxu0 0.0
    %112 = vmatprep.subr.mxu0 0.0
    %113 = vmatpush1.msra.mxu0 0.0
    %114 = vmatprep.subr.mxu0 0.0
    %115 = vmatpush1.msra.mxu0 0.0
    %116 = vmatprep.subr.mxu0 0.0
    %117 = vmatpush1.msra.mxu0 0.0
    %118 = vmatprep.subr.mxu0 0.0
    %119 = vmatpush1.msra.mxu0 0.0
    %120 = vmatprep.subr.mxu0 0.0
    %121 = vmatpush1.msra.mxu0 0.0
    %122 = vmatprep.subr.mxu0 0.0
    %123 = vmatpush1.msra.mxu0 0.0
    %124 = vmatprep.subr.mxu0 0.0
    %125 = vmatpush1.msra.mxu0 0.0
    %126 = vmatprep.subr.mxu0 0.0
    %127 = vmatpush1.msra.mxu0 0.0
    %128 = vmatprep.subr.mxu0 0.0
    %129 = vmatpush1.msra.mxu0 0.0
    %130 = vmatprep.subr.mxu0 0.0
    %131 = vmatpush1.msra.mxu0 0.0
    %132 = vmatprep.subr.mxu0 0.0
    %133 = vmatpush1.msra.mxu0 0.0
    %134 = vmatprep.subr.mxu0 0.0
    %135 = vmatpush1.msra.mxu0 0.0
    %136 = vmatprep.subr.mxu0 0.0
    %137 = vmatpush1.msra.mxu0 0.0
    %138 = vmatprep.subr.mxu0 0.0
    %139 = vmatpush1.msra.mxu0 0.0
    %140 = vmatprep.subr.mxu0 0.0
    %141 = vmatpush1.msra.mxu0 0.0
    %142 = vmatprep.subr.mxu0 0.0
    %143 = vmatpush1.msra.mxu0 0.0
    %144 = vmatprep.subr.mxu0 0.0
    %145 = vmatpush1.msra.mxu0 0.0
    %146 = vmatprep.subr.mxu0 0.0
    %147 = vmatpush1.msra.mxu0 0.0
    %148 = vmatprep.subr.mxu0 0.0
    %149 = vmatpush1.msra.mxu0 0.0
    %150 = vmatprep.subr.mxu0 0.0
    %151 = vmatpush1.msra.mxu0 0.0
    %152 = vmatprep.mubr.f32.mxu0 0.0
    %153 = vmatmul.mubr.f32.gmra.mrb[0].mxu0 %v83
    %v154 = vpop.f32.mrb[0].mxu0
    %v155 = vadd.f32 %v79, %v154
    %v156 = vpop.f32.mrb[0].mxu0
    %157 = vmatprep.mubr.f32.mxu0 0.0
    %158 = vmatmul.mubr.f32.gmra.mrb[0].mxu0 %v86
    %v159 = vpop.f32.mrb[0].mxu0
    %v160 = vadd.f32 %v79, %v159
    %v161 = vpop.f32.mrb[0].mxu0
    %162 = vdwg.mxu0
    %v163 = vmax.f32 %v155, 0.0
    %v164 = vmax.f32 %v160, 0.0
    %v165 = vld [vmem:[#allocation5] sm:$0xff]
    %v166 = vld [vmem:[#allocation5 + $0x8] sm:$0xff]
    %v167 = vld [vmem:[#allocation5 + $0x10] sm:$0xff]
    %v168 = vld [vmem:[#allocation5 + $0x18] sm:$0xff]
    %v169 = vld [vmem:[#allocation5 + $0x20] sm:$0xff]
    %v170 = vld [vmem:[#allocation5 + $0x28] sm:$0xff]
    %v171 = vld [vmem:[#allocation5 + $0x30] sm:$0xff]
    %v172 = vld [vmem:[#allocation5 + $0x38] sm:$0xff]
    %v173 = vld [vmem:[#allocation5 + $0x40] sm:$0xff]
    %v174 = vld [vmem:[#allocation5 + $0x48] sm:$0xff]
    %v175 = vld [vmem:[#allocation5 + $0x50] sm:$0xff]
    %v176 = vld [vmem:[#allocation5 + $0x58] sm:$0xff]
    %v177 = vld [vmem:[#allocation5 + $0x60] sm:$0xff]
    %v178 = vld [vmem:[#allocation5 + $0x68] sm:$0xff]
    %v179 = vld [vmem:[#allocation5 + $0x70] sm:$0xff]
    %v180 = vld [vmem:[#allocation5 + $0x78] sm:$0xff]
    %v181 = vld [vmem:[%s4] sm:$0x1]
    %v183 = vlaneseq
    %v184 = vshrl.u32 %v183, 7
    %v185 = vsub.s32 0, %v184
    %v186 = vrot.slane %v181, %v185
    %188 = vmatprep.subr.mxu0 0.0
    %189 = vmatpush1.msra.mxu0 %v165
    %190 = vmatprep.subr.mxu0 0.0
    %191 = vmatpush1.msra.mxu0 %v166
    %192 = vmatprep.subr.mxu0 0.0
    %193 = vmatpush1.msra.mxu0 %v167
    %194 = vmatprep.subr.mxu0 0.0
    %195 = vmatpush1.msra.mxu0 %v168
    %196 = vmatprep.subr.mxu0 0.0
    %197 = vmatpush1.msra.mxu0 %v169
    %198 = vmatprep.subr.mxu0 0.0
    %199 = vmatpush1.msra.mxu0 %v170
    %200 = vmatprep.subr.mxu0 0.0
    %201 = vmatpush1.msra.mxu0 %v171
    %202 = vmatprep.subr.mxu0 0.0
    %203 = vmatpush1.msra.mxu0 %v172
    %204 = vmatprep.subr.mxu0 0.0
    %205 = vmatpush1.msra.mxu0 %v173
    %206 = vmatprep.subr.mxu0 0.0
    %207 = vmatpush1.msra.mxu0 %v174
    %208 = vmatprep.subr.mxu0 0.0
    %209 = vmatpush1.msra.mxu0 %v175
    %210 = vmatprep.subr.mxu0 0.0
    %211 = vmatpush1.msra.mxu0 %v176
    %212 = vmatprep.subr.mxu0 0.0
    %213 = vmatpush1.msra.mxu0 %v177
    %214 = vmatprep.subr.mxu0 0.0
    %215 = vmatpush1.msra.mxu0 %v178
    %216 = vmatprep.subr.mxu0 0.0
    %217 = vmatpush1.msra.mxu0 %v179
    %218 = vmatprep.subr.mxu0 0.0
    %219 = vmatpush1.msra.mxu0 %v180
    %220 = vmatprep.subr.mxu0 0.0
    %221 = vmatpush1.msra.mxu0 0.0
    %222 = vmatprep.subr.mxu0 0.0
    %223 = vmatpush1.msra.mxu0 0.0
    %224 = vmatprep.subr.mxu0 0.0
    %225 = vmatpush1.msra.mxu0 0.0
    %226 = vmatprep.subr.mxu0 0.0
    %227 = vmatpush1.msra.mxu0 0.0
    %228 = vmatprep.subr.mxu0 0.0
    %229 = vmatpush1.msra.mxu0 0.0
    %230 = vmatprep.subr.mxu0 0.0
    %231 = vmatpush1.msra.mxu0 0.0
    %232 = vmatprep.subr.mxu0 0.0
    %233 = vmatpush1.msra.mxu0 0.0
    %234 = vmatprep.subr.mxu0 0.0
    %235 = vmatpush1.msra.mxu0 0.0
    %236 = vmatprep.subr.mxu0 0.0
    %237 = vmatpush1.msra.mxu0 0.0
    %238 = vmatprep.subr.mxu0 0.0
    %239 = vmatpush1.msra.mxu0 0.0
    %240 = vmatprep.subr.mxu0 0.0
    %241 = vmatpush1.msra.mxu0 0.0
    %242 = vmatprep.subr.mxu0 0.0
    %243 = vmatpush1.msra.mxu0 0.0
    %244 = vmatprep.subr.mxu0 0.0
    %245 = vmatpush1.msra.mxu0 0.0
    %246 = vmatprep.subr.mxu0 0.0
    %247 = vmatpush1.msra.mxu0 0.0
    %248 = vmatprep.subr.mxu0 0.0
    %249 = vmatpush1.msra.mxu0 0.0
    %250 = vmatprep.subr.mxu0 0.0
    %251 = vmatpush1.msra.mxu0 0.0
    %252 = vmatprep.mubr.f32.mxu0 0.0
    %253 = vmatmul.mubr.f32.gmra.mrb[0].mxu0 %v163
    %v254 = vpop.f32.mrb[0].mxu0
    %v255 = vadd.f32 %v186, %v254
    %v256 = vpop.f32.mrb[0].mxu0
    %257 = vmatprep.mubr.f32.mxu0 0.0
    %258 = vmatmul.mubr.f32.gmra.mrb[0].mxu0 %v164
    %v259 = vpop.f32.mrb[0].mxu0
    %v260 = vadd.f32 %v186, %v259
    %v261 = vpop.f32.mrb[0].mxu0
    %262 = vdwg.mxu0
    %v263 = vmax.f32 %v255, 0.0
    %v264 = vmax.f32 %v260, 0.0
    %v265 = vld [vmem:[#allocation7] sm:$0xff]
    %v266 = vld [vmem:[#allocation7 + $0x8] sm:$0xff]
    %v267 = vld [vmem:[#allocation7 + $0x10] sm:$0xff]
    %v268 = vld [vmem:[#allocation7 + $0x18] sm:$0xff]
    %v269 = vld [vmem:[#allocation7 + $0x20] sm:$0xff]
    %v270 = vld [vmem:[#allocation7 + $0x28] sm:$0xff]
    %v271 = vld [vmem:[#allocation7 + $0x30] sm:$0xff]
    %v272 = vld [vmem:[#allocation7 + $0x38] sm:$0xff]
    %v273 = vld [vmem:[#allocation7 + $0x40] sm:$0xff]
    %v274 = vld [vmem:[#allocation7 + $0x48] sm:$0xff]
    %v275 = vld [vmem:[#allocation7 + $0x50] sm:$0xff]
    %v276 = vld [vmem:[#allocation7 + $0x58] sm:$0xff]
    %v277 = vld [vmem:[#allocation7 + $0x60] sm:$0xff]
    %v278 = vld [vmem:[#allocation7 + $0x68] sm:$0xff]
    %v279 = vld [vmem:[#allocation7 + $0x70] sm:$0xff]
    %v280 = vld [vmem:[#allocation7 + $0x78] sm:$0xff]
    %v281 = vld [vmem:[%s6] sm:$0x1]
    %v283 = vlaneseq
    %v284 = vshrl.u32 %v283, 7
    %v285 = vsub.s32 0, %v284
    %v286 = vrot.slane %v281, %v285
    %288 = vmatprep.subr.mxu0 0.0
    %289 = vmatpush1.msra.mxu0 %v265
    %290 = vmatprep.subr.mxu0 0.0
    %291 = vmatpush1.msra.mxu0 %v266
    %292 = vmatprep.subr.mxu0 0.0
    %293 = vmatpush1.msra.mxu0 %v267
    %294 = vmatprep.subr.mxu0 0.0
    %295 = vmatpush1.msra.mxu0 %v268
    %296 = vmatprep.subr.mxu0 0.0
    %297 = vmatpush1.msra.mxu0 %v269
    %298 = vmatprep.subr.mxu0 0.0
    %299 = vmatpush1.msra.mxu0 %v270
    %300 = vmatprep.subr.mxu0 0.0
    %301 = vmatpush1.msra.mxu0 %v271
    %302 = vmatprep.subr.mxu0 0.0
    %303 = vmatpush1.msra.mxu0 %v272
    %304 = vmatprep.subr.mxu0 0.0
    %305 = vmatpush1.msra.mxu0 %v273
    %306 = vmatprep.subr.mxu0 0.0
    %307 = vmatpush1.msra.mxu0 %v274
    %308 = vmatprep.subr.mxu0 0.0
    %309 = vmatpush1.msra.mxu0 %v275
    %310 = vmatprep.subr.mxu0 0.0
    %311 = vmatpush1.msra.mxu0 %v276
    %312 = vmatprep.subr.mxu0 0.0
    %313 = vmatpush1.msra.mxu0 %v277
    %314 = vmatprep.subr.mxu0 0.0
    %315 = vmatpush1.msra.mxu0 %v278
    %316 = vmatprep.subr.mxu0 0.0
    %317 = vmatpush1.msra.mxu0 %v279
    %318 = vmatprep.subr.mxu0 0.0
    %319 = vmatpush1.msra.mxu0 %v280
    %320 = vmatprep.subr.mxu0 0.0
    %321 = vmatpush1.msra.mxu0 0.0
    %322 = vmatprep.subr.mxu0 0.0
    %323 = vmatpush1.msra.mxu0 0.0
    %324 = vmatprep.subr.mxu0 0.0
    %325 = vmatpush1.msra.mxu0 0.0
    %326 = vmatprep.subr.mxu0 0.0
    %327 = vmatpush1.msra.mxu0 0.0
    %328 = vmatprep.subr.mxu0 0.0
    %329 = vmatpush1.msra.mxu0 0.0
    %330 = vmatprep.subr.mxu0 0.0
    %331 = vmatpush1.msra.mxu0 0.0
    %332 = vmatprep.subr.mxu0 0.0
    %333 = vmatpush1.msra.mxu0 0.0
    %334 = vmatprep.subr.mxu0 0.0
    %335 = vmatpush1.msra.mxu0 0.0
    %336 = vmatprep.subr.mxu0 0.0
    %337 = vmatpush1.msra.mxu0 0.0
    %338 = vmatprep.subr.mxu0 0.0
    %339 = vmatpush1.msra.mxu0 0.0
    %340 = vmatprep.subr.mxu0 0.0
    %341 = vmatpush1.msra.mxu0 0.0
    %342 = vmatprep.subr.mxu0 0.0
    %343 = vmatpush1.msra.mxu0 0.0
    %344 = vmatprep.subr.mxu0 0.0
    %345 = vmatpush1.msra.mxu0 0.0
    %346 = vmatprep.subr.mxu0 0.0
    %347 = vmatpush1.msra.mxu0 0.0
    %348 = vmatprep.subr.mxu0 0.0
    %349 = vmatpush1.msra.mxu0 0.0
    %350 = vmatprep.subr.mxu0 0.0
    %351 = vmatpush1.msra.mxu0 0.0
    %352 = vmatprep.mubr.f32.mxu0 0.0
    %353 = vmatmul.mubr.f32.gmra.mrb[0].mxu0 %v263
    %v354 = vpop.f32.mrb[0].mxu0
    %v355 = vadd.f32 %v286, %v354
    %v356 = vpop.f32.mrb[0].mxu0
    %357 = vmatprep.mubr.f32.mxu0 0.0
    %358 = vmatmul.mubr.f32.gmra.mrb[0].mxu0 %v264
    %v359 = vpop.f32.mrb[0].mxu0
    %v360 = vadd.f32 %v286, %v359
    %v361 = vpop.f32.mrb[0].mxu0
    %362 = vdwg.mxu0
    %363 = vst [vmem:[#allocation8] sm:$0xff] %v355
    %364 = vst [vmem:[#allocation8 + $0x8] sm:$0xff] %v360
    // Predicated region
    $region42: #{_forward_padded.1} parent=1 // pred_check
      _
    $region43: #{_forward_padded.1} parent=1 // pred_check_branch
      %366 = sbr.rel (0) target = $region45
    $region44: #{_forward_padded.1} parent=1 // pred_region
      %s368 = ssub.s32 256, 256
      %369 = vsyncadd [#allocation4], %s368
      %s370 = sshll.u32 [#allocation8], 4
      %s371 = int_to_ptr.vmem [resolvable:$true] %s370
      %376 = dma.vmem_to_hbm [thread:$0]  %s371, 256, %s7, [#allocation4], 128, 128, 8
    $region45: #{_forward_padded.1} parent=1 // pred_fallthru
      _
    // Predicated region
    $region46: #{_forward_padded.1} parent=1 // pred_check
      _
    $region47: #{_forward_padded.1} parent=1 // pred_check_branch
      %378 = sbr.rel (0) target = $region49
    $region48: #{_forward_padded.1} parent=1 // pred_region
      %379 = dma.done [#allocation4], 256
    $region49: #{_forward_padded.1} parent=1 // pred_fallthru
      _
    %380 = vsyncpa [#allocation3], 1
    %381 = vsyncpa [#allocation6], 1
    %382 = vsyncpa [#allocation4], 1

// kernel: _forward_padded.1
$region0: #{_forward_padded.1}
  #allocation0 [shape = 'u32[]', space=smem, size = 0x4, offset = 0x4, fixed_abs, tag = 'smem constant byte address 0x4 - core index']
  #allocation1 [shape = 'u32[144,128]{1,0:T(1,128)}', space=vmem, size = 0x12000, scoped, tag = 'internal scratch']
  %s0 = inlined_call_operand.vmem [shape: f32[16,32], index: 0, kind: input, shape index: {}]
  %s1 = inlined_call_operand.hbm [shape: f32[32,128], index: 1, kind: input, shape index: {}]
  %s2 = inlined_call_operand.vmem [shape: f32[1,128], index: 2, kind: input, shape index: {}]
  %s3 = inlined_call_operand.hbm [shape: f32[128,128], index: 3, kind: input, shape index: {}]
  %s4 = inlined_call_operand.vmem [shape: f32[1,128], index: 4, kind: input, shape index: {}]
  %s5 = inlined_call_operand.hbm [shape: f32[128,128], index: 5, kind: input, shape index: {}]
  %s6 = inlined_call_operand.vmem [shape: f32[1,128], index: 6, kind: input, shape index: {}]
  %s7 = inlined_call_operand.hbm [shape: f32[16,128], index: 7, kind: output, shape index: {}]
  %s8 = sld [smem:[#allocation0]]
  $region50: #{_forward_padded.1} parent=0
    _
  %s10 = ssub.s32 1, %s8
  %s11 = scalar_select 0, %s10, %s8
  $region1: #{_forward_padded.1} parent=0
    #allocation2 [shape = 'u8[16384]{0}', space=vmem, size = 0x4000, scoped, tag = 'input window, operand 1, single buffered']
    #allocation3 [shape = 's32[1]{0}', space=sflag, size = 0x4, scoped, tag = 'scoped memory for _forward_padded.1']
    #allocation4 [shape = 's32[1]{0}', space=sflag, size = 0x4, scoped, tag = 'scoped memory for _forward_padded.1']
    #allocation5 [shape = 'u8[65536]{0}', space=vmem, size = 0x10000, scoped, tag = 'input window, operand 3, single buffered']
    #allocation6 [shape = 's32[1]{0}', space=sflag, size = 0x4, scoped, tag = 'scoped memory for _forward_padded.1']
    #allocation7 [shape = 'u8[65536]{0}', space=vmem, size = 0x10000, scoped, tag = 'input window, operand 5, single buffered']
    #allocation8 [shape = 'u8[8192]{0}', space=vmem, size = 0x2000, scoped, tag = 'output window, operand 0, single buffered']
    %12 = vsyncpa [#allocation3], 0
    %13 = vsyncpa [#allocation6], 0
    %14 = vsyncpa [#allocation4], 0
    // Predicated region
    $region2: #{_forward_padded.1} parent=1 // pred_check
      _
    $region3: #{_forward_padded.1} parent=1 // pred_check_branch
      %16 = sbr.rel (0) target = $region5
    $region4: #{_forward_padded.1} parent=1 // pred_region
      _
    $region5: #{_forward_padded.1} parent=1 // pred_fallthru
      _
    // Predicated region
    $region6: #{_forward_padded.1} parent=1 // pred_check
      _
    $region7: #{_forward_padded.1} parent=1 // pred_check_branch
      %18 = sbr.rel (0) target = $region9
    $region8: #{_forward_padded.1} parent=1 // pred_region
      %s20 = ssub.s32 512, 512
      %21 = vsyncadd [#allocation3], %s20
      %s22 = sshll.u32 [#allocation2], 4
      %s23 = int_to_ptr.vmem [resolvable:$true] %s22
      %28 = dma.hbm_to_vmem [thread:$0]  %s1, 512, %s23, [#allocation3], 128, 128, 8
    $region9: #{_forward_padded.1} parent=1 // pred_fallthru
      _
    // Predicated region
    $region10: #{_forward_padded.1} parent=1 // pred_check
      _
    $region11: #{_forward_padded.1} parent=1 // pred_check_branch
      %30 = sbr.rel (0) target = $region13
    $region12: #{_forward_padded.1} parent=1 // pred_region
      _
    $region13: #{_forward_padded.1} parent=1 // pred_fallthru
      _
    // Predicated region
    $region14: #{_forward_padded.1} parent=1 // pred_check
      _
    $region15: #{_forward_padded.1} parent=1 // pred_check_branch
      %32 = sbr.rel (0) target = $region17
    $region16: #{_forward_padded.1} parent=1 // pred_region
      %s34 = ssub.s32 2048, 2048
      %35 = vsyncadd [#allocation6], %s34
      %s36 = sshll.u32 [#allocation5], 4
      %s37 = int_to_ptr.vmem [resolvable:$true] %s36
      %42 = dma.hbm_to_vmem [thread:$0]  %s3, 2048, %s37, [#allocation6], 128, 128, 8
    $region17: #{_forward_padded.1} parent=1 // pred_fallthru
      _
    // Predicated region
    $region18: #{_forward_padded.1} parent=1 // pred_check
      _
    $region19: #{_forward_padded.1} parent=1 // pred_check_branch
      %44 = sbr.rel (0) target = $region21
    $region20: #{_forward_padded.1} parent=1 // pred_region
      _
    $region21: #{_forward_padded.1} parent=1 // pred_fallthru
      _
    // Predicated region
    $region22: #{_forward_padded.1} parent=1 // pred_check
      _
    $region23: #{_forward_padded.1} parent=1 // pred_check_branch
      %46 = sbr.rel (0) target = $region25
    $region24: #{_forward_padded.1} parent=1 // pred_region
      %s48 = ssub.s32 2048, 2048
      %49 = vsyncadd [#allocation6], %s48
      %s50 = sshll.u32 [#allocation7], 4
      %s51 = int_to_ptr.vmem [resolvable:$true] %s50
      %56 = dma.hbm_to_vmem [thread:$0]  %s5, 2048, %s51, [#allocation6], 128, 128, 8
    $region25: #{_forward_padded.1} parent=1 // pred_fallthru
      _
    // Predicated region
    $region26: #{_forward_padded.1} parent=1 // pred_check
      _
    $region27: #{_forward_padded.1} parent=1 // pred_check_branch
      %58 = sbr.rel (0) target = $region29
    $region28: #{_forward_padded.1} parent=1 // pred_region
      _
    $region29: #{_forward_padded.1} parent=1 // pred_fallthru
      _
    // Predicated region
    $region30: #{_forward_padded.1} parent=1 // pred_check
      _
    $region31: #{_forward_padded.1} parent=1 // pred_check_branch
      %60 = sbr.rel (0) target = $region33
    $region32: #{_forward_padded.1} parent=1 // pred_region
      %61 = dma.done [#allocation3], 512
    $region33: #{_forward_padded.1} parent=1 // pred_fallthru
      _
    // Predicated region
    $region34: #{_forward_padded.1} parent=1 // pred_check
      _
    $region35: #{_forward_padded.1} parent=1 // pred_check_branch
      %63 = sbr.rel (0) target = $region37
    $region36: #{_forward_padded.1} parent=1 // pred_region
      %64 = dma.done [#allocation6], 2048
    $region37: #{_forward_padded.1} parent=1 // pred_fallthru
      _
    // Predicated region
    $region38: #{_forward_padded.1} parent=1 // pred_check
      _
    $region39: #{_forward_padded.1} parent=1 // pred_check_branch
      %66 = sbr.rel (0) target = $region41
    $region40: #{_forward_padded.1} parent=1 // pred_region
      %67 = dma.done [#allocation6], 2048
    $region41: #{_forward_padded.1} parent=1 // pred_fallthru
      _
    %v68 = vld [vmem:[%s0] sm:$0xff]
    %v69 = vld [vmem:[%s0 + $0x8] sm:$0xff]
    %v70 = vld [vmem:[#allocation2] sm:$0xff]
    %v71 = vld [vmem:[#allocation2 + $0x8] sm:$0xff]
    %v72 = vld [vmem:[#allocation2 + $0x10] sm:$0xff]
    %v73 = vld [vmem:[#allocation2 + $0x18] sm:$0xff]
    %v74 = vld [vmem:[%s2] sm:$0x1]
    %v76 = vlaneseq
    %v77 = vshrl.u32 %v76, 7
    %v78 = vsub.s32 0, %v77
    %v79 = vrot.slane %v74, %v78
    %vm81 = vcmask 261120
    %v83 = vsel %vm81, %v68, 0
    %v86 = vsel %vm81, %v69, 0
    %88 = vmatprep.subr.mxu0 0.0
    %89 = vmatpush1.msra.mxu0 %v70
    %90 = vmatprep.subr.mxu0 0.0
    %91 = vmatpush1.msra.mxu0 %v71
    %92 = vmatprep.subr.mxu0 0.0
    %93 = vmatpush1.msra.mxu0 %v72
    %94 = vmatprep.subr.mxu0 0.0
    %95 = vmatpush1.msra.mxu0 %v73
    %96 = vmatprep.subr.mxu0 0.0
    %97 = vmatpush1.msra.mxu0 0.0
    %98 = vmatprep.subr.mxu0 0.0
    %99 = vmatpush1.msra.mxu0 0.0
    %100 = vmatprep.subr.mxu0 0.0
    %101 = vmatpush1.msra.mxu0 0.0
    %102 = vmatprep.subr.mxu0 0.0
    %103 = vmatpush1.msra.mxu0 0.0
    %104 = vmatprep.subr.mxu0 0.0
    %105 = vmatpush1.msra.mxu0 0.0
    %106 = vmatprep.subr.mxu0 0.0
    %107 = vmatpush1.msra.mxu0 0.0
    %108 = vmatprep.subr.mxu0 0.0
    %109 = vmatpush1.msra.mxu0 0.0
    %110 = vmatprep.subr.mxu0 0.0
    %111 = vmatpush1.msra.mxu0 0.0
    %112 = vmatprep.subr.mxu0 0.0
    %113 = vmatpush1.msra.mxu0 0.0
    %114 = vmatprep.subr.mxu0 0.0
    %115 = vmatpush1.msra.mxu0 0.0
    %116 = vmatprep.subr.mxu0 0.0
    %117 = vmatpush1.msra.mxu0 0.0
    %118 = vmatprep.subr.mxu0 0.0
    %119 = vmatpush1.msra.mxu0 0.0
    %120 = vmatprep.subr.mxu0 0.0
    %121 = vmatpush1.msra.mxu0 0.0
    %122 = vmatprep.subr.mxu0 0.0
    %123 = vmatpush1.msra.mxu0 0.0
    %124 = vmatprep.subr.mxu0 0.0
    %125 = vmatpush1.msra.mxu0 0.0
    %126 = vmatprep.subr.mxu0 0.0
    %127 = vmatpush1.msra.mxu0 0.0
    %128 = vmatprep.subr.mxu0 0.0
    %129 = vmatpush1.msra.mxu0 0.0
    %130 = vmatprep.subr.mxu0 0.0
    %131 = vmatpush1.msra.mxu0 0.0
    %132 = vmatprep.subr.mxu0 0.0
    %133 = vmatpush1.msra.mxu0 0.0
    %134 = vmatprep.subr.mxu0 0.0
    %135 = vmatpush1.msra.mxu0 0.0
    %136 = vmatprep.subr.mxu0 0.0
    %137 = vmatpush1.msra.mxu0 0.0
    %138 = vmatprep.subr.mxu0 0.0
    %139 = vmatpush1.msra.mxu0 0.0
    %140 = vmatprep.subr.mxu0 0.0
    %141 = vmatpush1.msra.mxu0 0.0
    %142 = vmatprep.subr.mxu0 0.0
    %143 = vmatpush1.msra.mxu0 0.0
    %144 = vmatprep.subr.mxu0 0.0
    %145 = vmatpush1.msra.mxu0 0.0
    %146 = vmatprep.subr.mxu0 0.0
    %147 = vmatpush1.msra.mxu0 0.0
    %148 = vmatprep.subr.mxu0 0.0
    %149 = vmatpush1.msra.mxu0 0.0
    %150 = vmatprep.subr.mxu0 0.0
    %151 = vmatpush1.msra.mxu0 0.0
    %152 = vmatprep.mubr.f32.mxu0 0.0
    %153 = vmatmul.mubr.f32.gmra.mrb[0].mxu0 %v83
    %v154 = vpop.f32.mrb[0].mxu0
    %v155 = vadd.f32 %v79, %v154
    %v156 = vpop.f32.mrb[0].mxu0
    %157 = vmatprep.mubr.f32.mxu0 0.0
    %158 = vmatmul.mubr.f32.gmra.mrb[0].mxu0 %v86
    %v159 = vpop.f32.mrb[0].mxu0
    %v160 = vadd.f32 %v79, %v159
    %v161 = vpop.f32.mrb[0].mxu0
    %162 = vdwg.mxu0
    %v163 = vmax.f32 %v155, 0.0
    %v164 = vmax.f32 %v160, 0.0
    %v165 = vld [vmem:[#allocation5] sm:$0xff]
    %v166 = vld [vmem:[#allocation5 + $0x8] sm:$0xff]
    %v167 = vld [vmem:[#allocation5 + $0x10] sm:$0xff]
    %v168 = vld [vmem:[#allocation5 + $0x18] sm:$0xff]
    %v169 = vld [vmem:[#allocation5 + $0x20] sm:$0xff]
    %v170 = vld [vmem:[#allocation5 + $0x28] sm:$0xff]
    %v171 = vld [vmem:[#allocation5 + $0x30] sm:$0xff]
    %v172 = vld [vmem:[#allocation5 + $0x38] sm:$0xff]
    %v173 = vld [vmem:[#allocation5 + $0x40] sm:$0xff]
    %v174 = vld [vmem:[#allocation5 + $0x48] sm:$0xff]
    %v175 = vld [vmem:[#allocation5 + $0x50] sm:$0xff]
    %v176 = vld [vmem:[#allocation5 + $0x58] sm:$0xff]
    %v177 = vld [vmem:[#allocation5 + $0x60] sm:$0xff]
    %v178 = vld [vmem:[#allocation5 + $0x68] sm:$0xff]
    %v179 = vld [vmem:[#allocation5 + $0x70] sm:$0xff]
    %v180 = vld [vmem:[#allocation5 + $0x78] sm:$0xff]
    %v181 = vld [vmem:[%s4] sm:$0x1]
    %v183 = vlaneseq
    %v184 = vshrl.u32 %v183, 7
    %v185 = vsub.s32 0, %v184
    %v186 = vrot.slane %v181, %v185
    %188 = vmatprep.subr.mxu0 0.0
    %189 = vmatpush1.msra.mxu0 %v165
    %190 = vmatprep.subr.mxu0 0.0
    %191 = vmatpush1.msra.mxu0 %v166
    %192 = vmatprep.subr.mxu0 0.0
    %193 = vmatpush1.msra.mxu0 %v167
    %194 = vmatprep.subr.mxu0 0.0
    %195 = vmatpush1.msra.mxu0 %v168
    %196 = vmatprep.subr.mxu0 0.0
    %197 = vmatpush1.msra.mxu0 %v169
    %198 = vmatprep.subr.mxu0 0.0
    %199 = vmatpush1.msra.mxu0 %v170
    %200 = vmatprep.subr.mxu0 0.0
    %201 = vmatpush1.msra.mxu0 %v171
    %202 = vmatprep.subr.mxu0 0.0
    %203 = vmatpush1.msra.mxu0 %v172
    %204 = vmatprep.subr.mxu0 0.0
    %205 = vmatpush1.msra.mxu0 %v173
    %206 = vmatprep.subr.mxu0 0.0
    %207 = vmatpush1.msra.mxu0 %v174
    %208 = vmatprep.subr.mxu0 0.0
    %209 = vmatpush1.msra.mxu0 %v175
    %210 = vmatprep.subr.mxu0 0.0
    %211 = vmatpush1.msra.mxu0 %v176
    %212 = vmatprep.subr.mxu0 0.0
    %213 = vmatpush1.msra.mxu0 %v177
    %214 = vmatprep.subr.mxu0 0.0
    %215 = vmatpush1.msra.mxu0 %v178
    %216 = vmatprep.subr.mxu0 0.0
    %217 = vmatpush1.msra.mxu0 %v179
    %218 = vmatprep.subr.mxu0 0.0
    %219 = vmatpush1.msra.mxu0 %v180
    %220 = vmatprep.subr.mxu0 0.0
    %221 = vmatpush1.msra.mxu0 0.0
    %222 = vmatprep.subr.mxu0 0.0
    %223 = vmatpush1.msra.mxu0 0.0
    %224 = vmatprep.subr.mxu0 0.0
    %225 = vmatpush1.msra.mxu0 0.0
    %226 = vmatprep.subr.mxu0 0.0
    %227 = vmatpush1.msra.mxu0 0.0
    %228 = vmatprep.subr.mxu0 0.0
    %229 = vmatpush1.msra.mxu0 0.0
    %230 = vmatprep.subr.mxu0 0.0
    %231 = vmatpush1.msra.mxu0 0.0
    %232 = vmatprep.subr.mxu0 0.0
    %233 = vmatpush1.msra.mxu0 0.0
    %234 = vmatprep.subr.mxu0 0.0
    %235 = vmatpush1.msra.mxu0 0.0
    %236 = vmatprep.subr.mxu0 0.0
    %237 = vmatpush1.msra.mxu0 0.0
    %238 = vmatprep.subr.mxu0 0.0
    %239 = vmatpush1.msra.mxu0 0.0
    %240 = vmatprep.subr.mxu0 0.0
    %241 = vmatpush1.msra.mxu0 0.0
    %242 = vmatprep.subr.mxu0 0.0
    %243 = vmatpush1.msra.mxu0 0.0
    %244 = vmatprep.subr.mxu0 0.0
    %245 = vmatpush1.msra.mxu0 0.0
    %246 = vmatprep.subr.mxu0 0.0
    %247 = vmatpush1.msra.mxu0 0.0
    %248 = vmatprep.subr.mxu0 0.0
    %249 = vmatpush1.msra.mxu0 0.0
    %250 = vmatprep.subr.mxu0 0.0
    %251 = vmatpush1.msra.mxu0 0.0
    %252 = vmatprep.mubr.f32.mxu0 0.0
    %253 = vmatmul.mubr.f32.gmra.mrb[0].mxu0 %v163
    %v254 = vpop.f32.mrb[0].mxu0
    %v255 = vadd.f32 %v186, %v254
    %v256 = vpop.f32.mrb[0].mxu0
    %257 = vmatprep.mubr.f32.mxu0 0.0
    %258 = vmatmul.mubr.f32.gmra.mrb[0].mxu0 %v164
    %v259 = vpop.f32.mrb[0].mxu0
    %v260 = vadd.f32 %v186, %v259
    %v261 = vpop.f32.mrb[0].mxu0
    %262 = vdwg.mxu0
    %v263 = vmax.f32 %v255, 0.0
    %v264 = vmax.f32 %v260, 0.0
    %v265 = vld [vmem:[#allocation7] sm:$0xff]
    %v266 = vld [vmem:[#allocation7 + $0x8] sm:$0xff]
    %v267 = vld [vmem:[#allocation7 + $0x10] sm:$0xff]
    %v268 = vld [vmem:[#allocation7 + $0x18] sm:$0xff]
    %v269 = vld [vmem:[#allocation7 + $0x20] sm:$0xff]
    %v270 = vld [vmem:[#allocation7 + $0x28] sm:$0xff]
    %v271 = vld [vmem:[#allocation7 + $0x30] sm:$0xff]
    %v272 = vld [vmem:[#allocation7 + $0x38] sm:$0xff]
    %v273 = vld [vmem:[#allocation7 + $0x40] sm:$0xff]
    %v274 = vld [vmem:[#allocation7 + $0x48] sm:$0xff]
    %v275 = vld [vmem:[#allocation7 + $0x50] sm:$0xff]
    %v276 = vld [vmem:[#allocation7 + $0x58] sm:$0xff]
    %v277 = vld [vmem:[#allocation7 + $0x60] sm:$0xff]
    %v278 = vld [vmem:[#allocation7 + $0x68] sm:$0xff]
    %v279 = vld [vmem:[#allocation7 + $0x70] sm:$0xff]
    %v280 = vld [vmem:[#allocation7 + $0x78] sm:$0xff]
    %v281 = vld [vmem:[%s6] sm:$0x1]
    %v283 = vlaneseq
    %v284 = vshrl.u32 %v283, 7
    %v285 = vsub.s32 0, %v284
    %v286 = vrot.slane %v281, %v285
    %288 = vmatprep.subr.mxu0 0.0
    %289 = vmatpush1.msra.mxu0 %v265
    %290 = vmatprep.subr.mxu0 0.0
    %291 = vmatpush1.msra.mxu0 %v266
    %292 = vmatprep.subr.mxu0 0.0
    %293 = vmatpush1.msra.mxu0 %v267
    %294 = vmatprep.subr.mxu0 0.0
    %295 = vmatpush1.msra.mxu0 %v268
    %296 = vmatprep.subr.mxu0 0.0
    %297 = vmatpush1.msra.mxu0 %v269
    %298 = vmatprep.subr.mxu0 0.0
    %299 = vmatpush1.msra.mxu0 %v270
    %300 = vmatprep.subr.mxu0 0.0
    %301 = vmatpush1.msra.mxu0 %v271
    %302 = vmatprep.subr.mxu0 0.0
    %303 = vmatpush1.msra.mxu0 %v272
    %304 = vmatprep.subr.mxu0 0.0
    %305 = vmatpush1.msra.mxu0 %v273
    %306 = vmatprep.subr.mxu0 0.0
    %307 = vmatpush1.msra.mxu0 %v274
    %308 = vmatprep.subr.mxu0 0.0
    %309 = vmatpush1.msra.mxu0 %v275
    %310 = vmatprep.subr.mxu0 0.0
    %311 = vmatpush1.msra.mxu0 %v276
    %312 = vmatprep.subr.mxu0 0.0
    %313 = vmatpush1.msra.mxu0 %v277
    %314 = vmatprep.subr.mxu0 0.0
    %315 = vmatpush1.msra.mxu0 %v278
    %316 = vmatprep.subr.mxu0 0.0
    %317 = vmatpush1.msra.mxu0 %v279
    %318 = vmatprep.subr.mxu0 0.0
    %319 = vmatpush1.msra.mxu0 %v280
    %320 = vmatprep.subr.mxu0 0.0
    %321 = vmatpush1.msra.mxu0 0.0
    %322 = vmatprep.subr.mxu0 0.0
    %323 = vmatpush1.msra.mxu0 0.0
    %324 = vmatprep.subr.mxu0 0.0
    %325 = vmatpush1.msra.mxu0 0.0
    %326 = vmatprep.subr.mxu0 0.0
    %327 = vmatpush1.msra.mxu0 0.0
    %328 = vmatprep.subr.mxu0 0.0
    %329 = vmatpush1.msra.mxu0 0.0
    %330 = vmatprep.subr.mxu0 0.0
    %331 = vmatpush1.msra.mxu0 0.0
    %332 = vmatprep.subr.mxu0 0.0
    %333 = vmatpush1.msra.mxu0 0.0
    %334 = vmatprep.subr.mxu0 0.0
    %335 = vmatpush1.msra.mxu0 0.0
    %336 = vmatprep.subr.mxu0 0.0
    %337 = vmatpush1.msra.mxu0 0.0
    %338 = vmatprep.subr.mxu0 0.0
    %339 = vmatpush1.msra.mxu0 0.0
    %340 = vmatprep.subr.mxu0 0.0
    %341 = vmatpush1.msra.mxu0 0.0
    %342 = vmatprep.subr.mxu0 0.0
    %343 = vmatpush1.msra.mxu0 0.0
    %344 = vmatprep.subr.mxu0 0.0
    %345 = vmatpush1.msra.mxu0 0.0
    %346 = vmatprep.subr.mxu0 0.0
    %347 = vmatpush1.msra.mxu0 0.0
    %348 = vmatprep.subr.mxu0 0.0
    %349 = vmatpush1.msra.mxu0 0.0
    %350 = vmatprep.subr.mxu0 0.0
    %351 = vmatpush1.msra.mxu0 0.0
    %352 = vmatprep.mubr.f32.mxu0 0.0
    %353 = vmatmul.mubr.f32.gmra.mrb[0].mxu0 %v263
    %v354 = vpop.f32.mrb[0].mxu0
    %v355 = vadd.f32 %v286, %v354
    %v356 = vpop.f32.mrb[0].mxu0
    %357 = vmatprep.mubr.f32.mxu0 0.0
    %358 = vmatmul.mubr.f32.gmra.mrb[0].mxu0 %v264
    %v359 = vpop.f32.mrb[0].mxu0
    %v360 = vadd.f32 %v286, %v359
    %v361 = vpop.f32.mrb[0].mxu0
    %362 = vdwg.mxu0
    %363 = vst [vmem:[#allocation8] sm:$0xff] %v355
    %364 = vst [vmem:[#allocation8 + $0x8] sm:$0xff] %v360
    // Predicated region
    $region42: #{_forward_padded.1} parent=1 // pred_check
      _
    $region43: #{_forward_padded.1} parent=1 // pred_check_branch
      %366 = sbr.rel (0) target = $region45
    $region44: #{_forward_padded.1} parent=1 // pred_region
      %s368 = ssub.s32 256, 256
      %369 = vsyncadd [#allocation4], %s368
      %s370 = sshll.u32 [#allocation8], 4
      %s371 = int_to_ptr.vmem [resolvable:$true] %s370
      %376 = dma.vmem_to_hbm [thread:$0]  %s371, 256, %s7, [#allocation4], 128, 128, 8
    $region45: #{_forward_padded.1} parent=1 // pred_fallthru
      _
    // Predicated region
    $region46: #{_forward_padded.1} parent=1 // pred_check
      _
    $region47: #{_forward_padded.1} parent=1 // pred_check_branch
      %378 = sbr.rel (0) target = $region49
    $region48: #{_forward_padded.1} parent=1 // pred_region
      %379 = dma.done [#allocation4], 256
    $region49: #{_forward_padded.1} parent=1 // pred_fallthru
      _
    %380 = vsyncpa [#allocation3], 1
    %381 = vsyncpa [#allocation6], 1
    %382 = vsyncpa [#allocation4], 1

</llo_original>
